<compile_context>
chip_gen: v5e
topology: v5e:2x2
jax: 0.10.0
libtpu: 0.0.40
codegen_flags: <defaults>
</compile_context>

<pallas_src>
import functools

import numpy as np
import jax
import jax.numpy as jnp
from jax.experimental import pallas as pl
from jax.experimental.pallas import tpu as pltpu

_LANE = 128


def _transformer_kernel(x_ref, emb_w_ref, emb_b_ref,
                        w_eff_ref, b_eff_ref,
                        fc_w_ref, fc_b_ref,
                        logits_ref, *, num_layers):
    # 1) embedding (positional-encoding row 0 is folded into the bias)
    h = jnp.dot(x_ref[...], emb_w_ref[...],
                preferred_element_type=jnp.float32) + emb_b_ref[...]

    # 2) num_layers x (attention collapsed to a single folded matmul per layer)
    for l in range(num_layers):
        h = jnp.dot(h, w_eff_ref[l],
                    preferred_element_type=jnp.float32) + b_eff_ref[l]

    # 3) classifier; fc weights are lane-padded to 128 outputs so this store is
    #    a dense (unmasked) write of a full vreg-width tile.
    logits_ref[...] = (jnp.dot(h, fc_w_ref[...],
                               preferred_element_type=jnp.float32)
                       + fc_b_ref[...])


def _round_up(n, m):
    return ((n + m - 1) // m) * m


def positional_encoding_row0(d_model):
    # PositionalEncoding buffer, row for position 0 (only row used: seq len 1).
    position = np.arange(1, dtype=np.float32)[:, None]
    div_term = np.exp(np.arange(0, d_model, 2, dtype=np.float32)
                      * (-np.log(10000.0) / d_model))
    pe = np.zeros((1, d_model), dtype=np.float32)
    pe[:, 0::2] = np.sin(position * div_term)
    pe[:, 1::2] = np.cos(position * div_term)
    return jnp.asarray(pe)


def make_params(key, input_dim, d_model, nhead, num_layers, num_classes=10):
    # Deterministic synthetic weights, already transposed to (in, out).
    keys = jax.random.split(key, 8)
    s = 0.05
    return {
        "emb_w": s * jax.random.normal(keys[0], (input_dim, d_model), jnp.float32),
        "emb_b": s * jax.random.normal(keys[1], (1, d_model), jnp.float32),
        "in_w":  s * jax.random.normal(keys[2], (num_layers, d_model, 3 * d_model), jnp.float32),
        "in_b":  s * jax.random.normal(keys[3], (num_layers, 1, 3 * d_model), jnp.float32),
        "out_w": s * jax.random.normal(keys[4], (num_layers, d_model, d_model), jnp.float32),
        "out_b": s * jax.random.normal(keys[5], (num_layers, 1, d_model), jnp.float32),
        "fc_w":  s * jax.random.normal(keys[6], (d_model, num_classes), jnp.float32),
        "fc_b":  s * jax.random.normal(keys[7], (1, num_classes), jnp.float32),
    }


def improved_transformer_forward(x, params, pe, *, num_layers, block_b=256):
    B, input_dim = x.shape
    d_model = params["emb_w"].shape[1]
    num_classes = params["fc_w"].shape[-1]

    # ---- one-time affine folding of the weights (outside the kernel) ----
    # softmax over a length-1 key axis == 1.0  =>  attention output == V proj.
    v_w = params["in_w"][:, :, 2 * d_model:3 * d_model]          # (L, D, D)
    v_b = params["in_b"][:, :, 2 * d_model:3 * d_model]          # (L, 1, D)
    w_eff = jnp.einsum("lij,ljk->lik", v_w, params["out_w"])     # (L, D, D)
    b_eff = jnp.einsum("lij,ljk->lik", v_b, params["out_w"]) + params["out_b"]
    emb_b_pe = params["emb_b"] + pe                              # (1, D)

    # lane-pad the classifier so the kernel's output tile is 128 wide
    nc_pad = _LANE
    fc_w_pad = jnp.zeros((d_model, nc_pad), jnp.float32).at[:, :num_classes].set(params["fc_w"])
    fc_b_pad = jnp.zeros((1, nc_pad), jnp.float32).at[:, :num_classes].set(params["fc_b"])

    # ---- batch tiling over the grid (weights VMEM-resident across steps) ----
    tb = min(block_b, _round_up(B, 8))
    b_pad = _round_up(B, tb)
    if b_pad != B:
        x = jnp.pad(x, ((0, b_pad - B), (0, 0)))
    n_tiles = b_pad // tb

    def const(nd):
        return lambda i: (0,) * nd

    logits_pad = pl.pallas_call(
        functools.partial(_transformer_kernel, num_layers=num_layers),
        grid=(n_tiles,),
        in_specs=[
            pl.BlockSpec((tb, input_dim), lambda i: (i, 0)),            # x: tiled over batch
            pl.BlockSpec((input_dim, d_model), const(2)),               # resident weights
            pl.BlockSpec((1, d_model), const(2)),
            pl.BlockSpec((num_layers, d_model, d_model), const(3)),
            pl.BlockSpec((num_layers, 1, d_model), const(3)),
            pl.BlockSpec((d_model, nc_pad), const(2)),
            pl.BlockSpec((1, nc_pad), const(2)),
        ],
        out_specs=pl.BlockSpec((tb, nc_pad), lambda i: (i, 0)),
        out_shape=jax.ShapeDtypeStruct((b_pad, nc_pad), jnp.float32),
        compiler_params=pltpu.CompilerParams(
            dimension_semantics=("parallel",)),   # lets v7x shard batch tiles over both TCs
    )(x, params["emb_w"], emb_b_pe, w_eff, b_eff, fc_w_pad, fc_b_pad)

    logits = logits_pad[:B, :num_classes]

    # need_weights=True, average_attn_weights=True over a length-1 sequence:
    # every attention weight is exactly 1.0 -> compile-time constant output.
    attn_weights = [jnp.ones((B, 1, 1), jnp.float32) for _ in range(num_layers)]
    return logits, attn_weights


def _reference(x, params, pe, nhead, num_layers):
    # Pure-JAX reference mirroring the PyTorch forward (full attention math,
    # no folding) to validate the algebraic simplifications in the kernel.
    h = x @ params["emb_w"] + params["emb_b"] + pe
    B, d_model = h.shape
    head_dim = d_model // nhead
    attns = []
    for l in range(num_layers):
        qkv = h @ params["in_w"][l] + params["in_b"][l]
        q = qkv[:, :d_model].reshape(B, nhead, 1, head_dim)
        k = qkv[:, d_model:2 * d_model].reshape(B, nhead, 1, head_dim)
        v = qkv[:, 2 * d_model:].reshape(B, nhead, 1, head_dim)
        scores = jnp.einsum("bhqd,bhkd->bhqk", q, k) / np.sqrt(head_dim)
        p = jax.nn.softmax(scores, axis=-1)                      # (B, nhead, 1, 1)
        out = jnp.einsum("bhqk,bhkd->bhqd", p, v).reshape(B, d_model)
        h = out @ params["out_w"][l] + params["out_b"][l]
        attns.append(p.mean(axis=1).reshape(B, 1, 1))
    logits = h @ params["fc_w"] + params["fc_b"]
    return logits, attns


if __name__ == "__main__":
    INPUT_DIM, D_MODEL, NHEAD, NUM_LAYERS, BATCH = 64, 32, 4, 3, 64

    key = jax.random.PRNGKey(0)
    kx, kp = jax.random.split(key)
    x = jax.random.normal(kx, (BATCH, INPUT_DIM), jnp.float32)
    params = make_params(kp, INPUT_DIM, D_MODEL, NHEAD, NUM_LAYERS)
    pe = positional_encoding_row0(D_MODEL)

    logits, attn_weights = improved_transformer_forward(
        x, params, pe, num_layers=NUM_LAYERS, block_b=32)   # grid=(2,)
    jax.block_until_ready(logits)
    jax.block_until_ready(attn_weights)

    # correctness check against the un-folded pure-JAX reference
    ref_logits, ref_attns = _reference(x, params, pe, NHEAD, NUM_LAYERS)
    assert logits.shape == (BATCH, 10)
    assert len(attn_weights) == NUM_LAYERS
    assert all(a.shape == (BATCH, 1, 1) for a in attn_weights)
    np.testing.assert_allclose(np.asarray(logits), np.asarray(ref_logits),
                               rtol=1e-4, atol=1e-5)
    for a, r in zip(attn_weights, ref_attns):
        np.testing.assert_allclose(np.asarray(a), np.asarray(r),
                                   rtol=1e-6, atol=1e-6)

    print("KERNEL_OK")
</pallas_src>

<mosaic_0001>
module attributes {stable_mosaic.version = 11 : i64} {
  func.func @_transformer_kernel(%arg0: i32, %arg1: memref<32x64xf32, #tpu.memory_space<vmem>>, %arg2: memref<64x32xf32, #tpu.memory_space<vmem>>, %arg3: memref<1x32xf32, #tpu.memory_space<vmem>>, %arg4: memref<3x32x32xf32, #tpu.memory_space<vmem>>, %arg5: memref<3x1x32xf32, #tpu.memory_space<vmem>>, %arg6: memref<32x128xf32, #tpu.memory_space<vmem>>, %arg7: memref<1x128xf32, #tpu.memory_space<vmem>>, %arg8: memref<32x128xf32, #tpu.memory_space<vmem>>) attributes {dimension_semantics = [#tpu.dimension_semantics<parallel>], iteration_bounds = array<i64: 2>, scalar_prefetch = 0 : i64, scratch_operands = 0 : i64, tpu.core_type = #tpu.core_type<tc>, window_params = [{transform_indices = @transform_0, window_bounds = array<i64: 32, 64>}, {pipeline_mode = #tpu.pipeline_mode<synchronous>, transform_indices = @transform_1, window_bounds = array<i64: 64, 32>}, {pipeline_mode = #tpu.pipeline_mode<synchronous>, transform_indices = @transform_2, window_bounds = array<i64: 1, 32>}, {pipeline_mode = #tpu.pipeline_mode<synchronous>, transform_indices = @transform_3, window_bounds = array<i64: 3, 32, 32>}, {pipeline_mode = #tpu.pipeline_mode<synchronous>, transform_indices = @transform_4, window_bounds = array<i64: 3, 1, 32>}, {pipeline_mode = #tpu.pipeline_mode<synchronous>, transform_indices = @transform_5, window_bounds = array<i64: 32, 128>}, {pipeline_mode = #tpu.pipeline_mode<synchronous>, transform_indices = @transform_6, window_bounds = array<i64: 1, 128>}, {transform_indices = @transform_7, window_bounds = array<i64: 32, 128>}]} {
    %c0 = arith.constant 0 : index
    %c0_0 = arith.constant 0 : index
    %0 = vector.load %arg1[%c0, %c0_0] : memref<32x64xf32, #tpu.memory_space<vmem>>, vector<32x64xf32>
    %c0_1 = arith.constant 0 : index
    %c0_2 = arith.constant 0 : index
    %1 = vector.load %arg2[%c0_1, %c0_2] : memref<64x32xf32, #tpu.memory_space<vmem>>, vector<64x32xf32>
    %cst = arith.constant dense<0.000000e+00> : vector<32x32xf32>
    %2 = tpu.matmul %0, %1, %cst {dimension_numbers = #tpu.dot_dimension_numbers<[1], [0], [0], [1], [0, 0, 1, 1], [], []>} : vector<32x64xf32>, vector<64x32xf32>, vector<32x32xf32> -> vector<32x32xf32>
    %c0_3 = arith.constant 0 : index
    %c0_4 = arith.constant 0 : index
    %3 = vector.load %arg3[%c0_3, %c0_4] : memref<1x32xf32, #tpu.memory_space<vmem>>, vector<1x32xf32>
    %4 = vector.broadcast %3 : vector<1x32xf32> to vector<32x32xf32>
    %5 = arith.addf %2, %4 : vector<32x32xf32>
    %c0_5 = arith.constant 0 : index
    %c0_6 = arith.constant 0 : index
    %c0_7 = arith.constant 0 : index
    %6 = vector.load %arg4[%c0_5, %c0_6, %c0_7] : memref<3x32x32xf32, #tpu.memory_space<vmem>>, vector<1x32x32xf32>
    %7 = vector.shape_cast %6 : vector<1x32x32xf32> to vector<32x32xf32>
    %cst_8 = arith.constant dense<0.000000e+00> : vector<32x32xf32>
    %8 = tpu.matmul %5, %7, %cst_8 {dimension_numbers = #tpu.dot_dimension_numbers<[1], [0], [0], [1], [0, 0, 1, 1], [], []>} : vector<32x32xf32>, vector<32x32xf32>, vector<32x32xf32> -> vector<32x32xf32>
    %c0_9 = arith.constant 0 : index
    %c0_10 = arith.constant 0 : index
    %c0_11 = arith.constant 0 : index
    %9 = vector.load %arg5[%c0_9, %c0_10, %c0_11] : memref<3x1x32xf32, #tpu.memory_space<vmem>>, vector<1x1x32xf32>
    %10 = vector.shape_cast %9 : vector<1x1x32xf32> to vector<1x32xf32>
    %11 = vector.broadcast %10 : vector<1x32xf32> to vector<32x32xf32>
    %12 = arith.addf %8, %11 : vector<32x32xf32>
    %c1 = arith.constant 1 : index
    %c0_12 = arith.constant 0 : index
    %c0_13 = arith.constant 0 : index
    %13 = vector.load %arg4[%c1, %c0_12, %c0_13] : memref<3x32x32xf32, #tpu.memory_space<vmem>>, vector<1x32x32xf32>
    %14 = vector.shape_cast %13 : vector<1x32x32xf32> to vector<32x32xf32>
    %cst_14 = arith.constant dense<0.000000e+00> : vector<32x32xf32>
    %15 = tpu.matmul %12, %14, %cst_14 {dimension_numbers = #tpu.dot_dimension_numbers<[1], [0], [0], [1], [0, 0, 1, 1], [], []>} : vector<32x32xf32>, vector<32x32xf32>, vector<32x32xf32> -> vector<32x32xf32>
    %c1_15 = arith.constant 1 : index
    %c0_16 = arith.constant 0 : index
    %c0_17 = arith.constant 0 : index
    %16 = vector.load %arg5[%c1_15, %c0_16, %c0_17] : memref<3x1x32xf32, #tpu.memory_space<vmem>>, vector<1x1x32xf32>
    %17 = vector.shape_cast %16 : vector<1x1x32xf32> to vector<1x32xf32>
    %18 = vector.broadcast %17 : vector<1x32xf32> to vector<32x32xf32>
    %19 = arith.addf %15, %18 : vector<32x32xf32>
    %c2 = arith.constant 2 : index
    %c0_18 = arith.constant 0 : index
    %c0_19 = arith.constant 0 : index
    %20 = vector.load %arg4[%c2, %c0_18, %c0_19] : memref<3x32x32xf32, #tpu.memory_space<vmem>>, vector<1x32x32xf32>
    %21 = vector.shape_cast %20 : vector<1x32x32xf32> to vector<32x32xf32>
    %cst_20 = arith.constant dense<0.000000e+00> : vector<32x32xf32>
    %22 = tpu.matmul %19, %21, %cst_20 {dimension_numbers = #tpu.dot_dimension_numbers<[1], [0], [0], [1], [0, 0, 1, 1], [], []>} : vector<32x32xf32>, vector<32x32xf32>, vector<32x32xf32> -> vector<32x32xf32>
    %c2_21 = arith.constant 2 : index
    %c0_22 = arith.constant 0 : index
    %c0_23 = arith.constant 0 : index
    %23 = vector.load %arg5[%c2_21, %c0_22, %c0_23] : memref<3x1x32xf32, #tpu.memory_space<vmem>>, vector<1x1x32xf32>
    %24 = vector.shape_cast %23 : vector<1x1x32xf32> to vector<1x32xf32>
    %25 = vector.broadcast %24 : vector<1x32xf32> to vector<32x32xf32>
    %26 = arith.addf %22, %25 : vector<32x32xf32>
    %c0_24 = arith.constant 0 : index
    %c0_25 = arith.constant 0 : index
    %27 = vector.load %arg6[%c0_24, %c0_25] : memref<32x128xf32, #tpu.memory_space<vmem>>, vector<32x128xf32>
    %cst_26 = arith.constant dense<0.000000e+00> : vector<32x128xf32>
    %28 = tpu.matmul %26, %27, %cst_26 {dimension_numbers = #tpu.dot_dimension_numbers<[1], [0], [0], [1], [0, 0, 1, 1], [], []>} : vector<32x32xf32>, vector<32x128xf32>, vector<32x128xf32> -> vector<32x128xf32>
    %c0_27 = arith.constant 0 : index
    %c0_28 = arith.constant 0 : index
    %29 = vector.load %arg7[%c0_27, %c0_28] : memref<1x128xf32, #tpu.memory_space<vmem>>, vector<1x128xf32>
    %30 = vector.broadcast %29 : vector<1x128xf32> to vector<32x128xf32>
    %31 = arith.addf %28, %30 : vector<32x128xf32>
    %c0_29 = arith.constant 0 : index
    %c0_30 = arith.constant 0 : index
    %32 = vector.load %arg8[%c0_29, %c0_30] : memref<32x128xf32, #tpu.memory_space<vmem>>, vector<32x128xf32>
    tpu.vector_store %arg8[%c0_29, %c0_30], %31 {strides = array<i32>} : memref<32x128xf32, #tpu.memory_space<vmem>>, vector<32x128xf32>,
    return
  }
  func.func @transform_0(%arg0: i32) -> (i32, i32) {
    %c0_i32 = arith.constant 0 : i32
    %c0_i32_0 = arith.constant 0 : i32
    return %arg0, %c0_i32 : i32, i32
  }
  func.func @transform_1(%arg0: i32) -> (i32, i32) {
    %c0_i32 = arith.constant 0 : i32
    %c0_i32_0 = arith.constant 0 : i32
    %c0_i32_1 = arith.constant 0 : i32
    return %c0_i32, %c0_i32_0 : i32, i32
  }
  func.func @transform_2(%arg0: i32) -> (i32, i32) {
    %c0_i32 = arith.constant 0 : i32
    %c0_i32_0 = arith.constant 0 : i32
    %c0_i32_1 = arith.constant 0 : i32
    return %c0_i32, %c0_i32_0 : i32, i32
  }
  func.func @transform_3(%arg0: i32) -> (i32, i32, i32) {
    %c0_i32 = arith.constant 0 : i32
    %c0_i32_0 = arith.constant 0 : i32
    %c0_i32_1 = arith.constant 0 : i32
    %c0_i32_2 = arith.constant 0 : i32
    return %c0_i32, %c0_i32_0, %c0_i32_1 : i32, i32, i32
  }
  func.func @transform_4(%arg0: i32) -> (i32, i32, i32) {
    %c0_i32 = arith.constant 0 : i32
    %c0_i32_0 = arith.constant 0 : i32
    %c0_i32_1 = arith.constant 0 : i32
    %c0_i32_2 = arith.constant 0 : i32
    return %c0_i32, %c0_i32_0, %c0_i32_1 : i32, i32, i32
  }
  func.func @transform_5(%arg0: i32) -> (i32, i32) {
    %c0_i32 = arith.constant 0 : i32
    %c0_i32_0 = arith.constant 0 : i32
    %c0_i32_1 = arith.constant 0 : i32
    return %c0_i32, %c0_i32_0 : i32, i32
  }
  func.func @transform_6(%arg0: i32) -> (i32, i32) {
    %c0_i32 = arith.constant 0 : i32
    %c0_i32_0 = arith.constant 0 : i32
    %c0_i32_1 = arith.constant 0 : i32
    return %c0_i32, %c0_i32_0 : i32, i32
  }
  func.func @transform_7(%arg0: i32) -> (i32, i32) {
    %c0_i32 = arith.constant 0 : i32
    %c0_i32_0 = arith.constant 0 : i32
    return %arg0, %c0_i32 : i32, i32
  }
}

</mosaic_0001>

<llo_original>
// kernel: tpu_custom_call.1
$region0: #{tpu_custom_call.1}
  #allocation0 [shape = 'u32[]', space=smem, size = 0x4, offset = 0x4, fixed_abs, tag = 'smem constant byte address 0x4 - core index']
  #allocation1 [shape = 'u32[72,128]{1,0:T(1,128)}', space=vmem, size = 0x9000, scoped, tag = 'internal scratch']
  %s0 = inlined_call_operand.hbm [shape: f32[64,64], index: 0, kind: input, shape index: {}]
  %s1 = inlined_call_operand.vmem [shape: f32[64,32], index: 1, kind: input, shape index: {}]
  %s2 = inlined_call_operand.hbm [shape: f32[1,32], index: 2, kind: input, shape index: {}]
  %s3 = inlined_call_operand.vmem [shape: f32[3,32,32], index: 3, kind: input, shape index: {}]
  %s4 = inlined_call_operand.vmem [shape: f32[3,1,32], index: 4, kind: input, shape index: {}]
  %s5 = inlined_call_operand.hbm [shape: f32[32,128], index: 5, kind: input, shape index: {}]
  %s6 = inlined_call_operand.vmem [shape: f32[1,128], index: 6, kind: input, shape index: {}]
  %s7 = inlined_call_operand.hbm [shape: f32[64,128], index: 7, kind: output, shape index: {}]
  %s8 = sld [smem:[#allocation0]]
  $region73: #{tpu_custom_call.1} parent=0
    _
  %s10 = ssub.s32 1, %s8
  %s11 = scalar_select 0, %s10, %s8
  $region1: #{tpu_custom_call.1} parent=0
    #allocation2 [shape = 'u8[32768]{0}', space=vmem, size = 0x8000, scoped, tag = 'input window, operand 0']
    #allocation3 [shape = 's32[2]{0}', space=sflag, size = 0x8, scoped, tag = 'scoped memory for tpu_custom_call.1']
    #allocation4 [shape = 's32[2]{0}', space=sflag, size = 0x8, scoped, tag = 'scoped memory for tpu_custom_call.1']
    #allocation5 [shape = 'u8[512]{0}', space=vmem, size = 0x400, scoped, tag = 'input window, operand 2, single buffered']
    #allocation6 [shape = 's32[1]{0}', space=sflag, size = 0x4, scoped, tag = 'scoped memory for tpu_custom_call.1']
    #allocation7 [shape = 'u8[16384]{0}', space=vmem, size = 0x4000, scoped, tag = 'input window, operand 5, single buffered']
    #allocation8 [shape = 'u8[32768]{0}', space=vmem, size = 0x8000, scoped, tag = 'output window, operand 0']
    %12 = vsyncpa [#allocation3], 0
    %s13 = scalar_lea.sflag [#allocation3], 1
    %14 = vsyncpa %s13, 0
    %15 = vsyncpa [#allocation6], 0
    %16 = vsyncpa [#allocation4], 0
    %s17 = scalar_lea.sflag [#allocation4], 1
    %18 = vsyncpa %s17, 0
    loop: start=0, step=1, limit=4
    $region2: #{tpu_custom_call.1} parent=1 // loop_pre_header
      _
    $region3: #{tpu_custom_call.1} parent=1 // loop_header
      %s20 = sphi 0, %s24
      %p21 = scmp.ge.s32.totalorder %s20, 4
      %s30 = sphi 0, %s32
      %s33 = sphi 0, %s30
      %s34 = sphi 0, %s33
      %s50 = sphi 0, %s34
      %s54 = sphi 0, %s54
      %s56 = sphi 0, %s54
      %s57 = sphi 0, %s56
      %s71 = sphi 0, %s57
      %s75 = sphi 0, %s75
      %s77 = sphi 0, %s75
      %s78 = sphi 0, %s77
      %s92 = sphi 0, %s78
      %s96 = sphi 0, %s96
      %s98 = sphi 0, %s96
      %s99 = sphi 0, %s98
      %s113 = sphi 0, %s99
      %s117 = sphi 0, %s117
      %s119 = sphi 0, %s117
      %s120 = sphi 0, %s119
      %s134 = sphi 0, %s120
      %s138 = sphi 0, %s138
      %s140 = sphi 0, %s138
      %s141 = sphi 0, %s140
      %s155 = sphi 0, %s141
      %s159 = sphi 0, %s159
      %s161 = sphi 0, %s159
      %s162 = sphi 0, %s161
      %s176 = sphi 0, %s162
      %s182 = sphi 0, %s184
      %s185 = sphi 0, %s182
      %s186 = sphi 0, %s185
      %s202 = sphi 0, %s186
    $region4: #{tpu_custom_call.1} parent=1 // loop_header_branch
      %23 = sbr.rel (%p21) target = $region8
    $region5: #{tpu_custom_call.1} parent=1 // loop_body
      %s25 = ssub.s32 %s20, 1
      %s26 = ssub.s32 %s20, 2
      %s27 = sadd.s32 %s20, 1
      %s28 = ssub.s32 %s20, %s27
      %p29 = scmp.eq.s32.totalorder %s28, 0
      %s31 = sadd.s32 %s30, 1
      %s32 = scalar_select %p29, %s30, %s31
      %p35 = pneg %p29
      %p36 = scmp.eq.s32.totalorder %s20, 1
      %p37 = por %p35, %p36
      %p38 = scmp.ne.s32.totalorder %s30, %s33
      %p39 = scmp.eq.s32.totalorder %s20, 0
      %p40 = por %p38, %p39
      %p41 = scmp.ne.s32.totalorder %s30, %s33
      %p42 = scmp.eq.s32.totalorder %s25, 1
      %p43 = por %p41, %p42
      %p44 = scmp.ne.s32.totalorder %s33, %s34
      %p45 = scmp.eq.s32.totalorder %s25, 0
      %p46 = por %p44, %p45
      %p47 = scmp.ne.s32.totalorder %s33, %s34
      %p48 = scmp.eq.s32.totalorder %s26, 1
      %p49 = por %p47, %p48
      %p51 = scmp.ne.s32.totalorder %s34, %s50
      %p52 = scmp.eq.s32.totalorder %s26, 0
      %p53 = por %p51, %p52
      %s55 = sadd.s32 %s54, 1
      %p58 = scmp.eq.s32.totalorder %s20, 1
      %p59 = scmp.ne.s32.totalorder %s54, %s56
      %p60 = scmp.eq.s32.totalorder %s20, 0
      %p61 = por %p59, %p60
      %p62 = scmp.ne.s32.totalorder %s54, %s56
      %p63 = scmp.eq.s32.totalorder %s25, 1
      %p64 = por %p62, %p63
      %p65 = scmp.ne.s32.totalorder %s56, %s57
      %p66 = scmp.eq.s32.totalorder %s25, 0
      %p67 = por %p65, %p66
      %p68 = scmp.ne.s32.totalorder %s56, %s57
      %p69 = scmp.eq.s32.totalorder %s26, 1
      %p70 = por %p68, %p69
      %p72 = scmp.ne.s32.totalorder %s57, %s71
      %p73 = scmp.eq.s32.totalorder %s26, 0
      %p74 = por %p72, %p73
      %s76 = sadd.s32 %s75, 1
      %p79 = scmp.eq.s32.totalorder %s20, 1
      %p80 = scmp.ne.s32.totalorder %s75, %s77
      %p81 = scmp.eq.s32.totalorder %s20, 0
      %p82 = por %p80, %p81
      %p83 = scmp.ne.s32.totalorder %s75, %s77
      %p84 = scmp.eq.s32.totalorder %s25, 1
      %p85 = por %p83, %p84
      %p86 = scmp.ne.s32.totalorder %s77, %s78
      %p87 = scmp.eq.s32.totalorder %s25, 0
      %p88 = por %p86, %p87
      %p89 = scmp.ne.s32.totalorder %s77, %s78
      %p90 = scmp.eq.s32.totalorder %s26, 1
      %p91 = por %p89, %p90
      %p93 = scmp.ne.s32.totalorder %s78, %s92
      %p94 = scmp.eq.s32.totalorder %s26, 0
      %p95 = por %p93, %p94
      %s97 = sadd.s32 %s96, 1
      %p100 = scmp.eq.s32.totalorder %s20, 1
      %p101 = scmp.ne.s32.totalorder %s96, %s98
      %p102 = scmp.eq.s32.totalorder %s20, 0
      %p103 = por %p101, %p102
      %p104 = scmp.ne.s32.totalorder %s96, %s98
      %p105 = scmp.eq.s32.totalorder %s25, 1
      %p106 = por %p104, %p105
      %p107 = scmp.ne.s32.totalorder %s98, %s99
      %p108 = scmp.eq.s32.totalorder %s25, 0
      %p109 = por %p107, %p108
      %p110 = scmp.ne.s32.totalorder %s98, %s99
      %p111 = scmp.eq.s32.totalorder %s26, 1
      %p112 = por %p110, %p111
      %p114 = scmp.ne.s32.totalorder %s99, %s113
      %p115 = scmp.eq.s32.totalorder %s26, 0
      %p116 = por %p114, %p115
      %s118 = sadd.s32 %s117, 1
      %p121 = scmp.eq.s32.totalorder %s20, 1
      %p122 = scmp.ne.s32.totalorder %s117, %s119
      %p123 = scmp.eq.s32.totalorder %s20, 0
      %p124 = por %p122, %p123
      %p125 = scmp.ne.s32.totalorder %s117, %s119
      %p126 = scmp.eq.s32.totalorder %s25, 1
      %p127 = por %p125, %p126
      %p128 = scmp.ne.s32.totalorder %s119, %s120
      %p129 = scmp.eq.s32.totalorder %s25, 0
      %p130 = por %p128, %p129
      %p131 = scmp.ne.s32.totalorder %s119, %s120
      %p132 = scmp.eq.s32.totalorder %s26, 1
      %p133 = por %p131, %p132
      %p135 = scmp.ne.s32.totalorder %s120, %s134
      %p136 = scmp.eq.s32.totalorder %s26, 0
      %p137 = por %p135, %p136
      %s139 = sadd.s32 %s138, 1
      %p142 = scmp.eq.s32.totalorder %s20, 1
      %p143 = scmp.ne.s32.totalorder %s138, %s140
      %p144 = scmp.eq.s32.totalorder %s20, 0
      %p145 = por %p143, %p144
      %p146 = scmp.ne.s32.totalorder %s138, %s140
      %p147 = scmp.eq.s32.totalorder %s25, 1
      %p148 = por %p146, %p147
      %p149 = scmp.ne.s32.totalorder %s140, %s141
      %p150 = scmp.eq.s32.totalorder %s25, 0
      %p151 = por %p149, %p150
      %p152 = scmp.ne.s32.totalorder %s140, %s141
      %p153 = scmp.eq.s32.totalorder %s26, 1
      %p154 = por %p152, %p153
      %p156 = scmp.ne.s32.totalorder %s141, %s155
      %p157 = scmp.eq.s32.totalorder %s26, 0
      %p158 = por %p156, %p157
      %s160 = sadd.s32 %s159, 1
      %p163 = scmp.eq.s32.totalorder %s20, 1
      %p164 = scmp.ne.s32.totalorder %s159, %s161
      %p165 = scmp.eq.s32.totalorder %s20, 0
      %p166 = por %p164, %p165
      %p167 = scmp.ne.s32.totalorder %s159, %s161
      %p168 = scmp.eq.s32.totalorder %s25, 1
      %p169 = por %p167, %p168
      %p170 = scmp.ne.s32.totalorder %s161, %s162
      %p171 = scmp.eq.s32.totalorder %s25, 0
      %p172 = por %p170, %p171
      %p173 = scmp.ne.s32.totalorder %s161, %s162
      %p174 = scmp.eq.s32.totalorder %s26, 1
      %p175 = por %p173, %p174
      %p177 = scmp.ne.s32.totalorder %s162, %s176
      %p178 = scmp.eq.s32.totalorder %s26, 0
      %p179 = por %p177, %p178
      %s180 = ssub.s32 %s20, %s27
      %p181 = scmp.eq.s32.totalorder %s180, 0
      %s183 = sadd.s32 %s182, 1
      %s184 = scalar_select %p181, %s182, %s183
      %p187 = pneg %p181
      %p188 = scmp.eq.s32.totalorder %s20, 1
      %p189 = por %p187, %p188
      %p190 = scmp.ne.s32.totalorder %s182, %s185
      %p191 = scmp.eq.s32.totalorder %s20, 0
      %p192 = por %p190, %p191
      %p193 = scmp.ne.s32.totalorder %s182, %s185
      %p194 = scmp.eq.s32.totalorder %s25, 1
      %p195 = por %p193, %p194
      %p196 = scmp.ne.s32.totalorder %s185, %s186
      %p197 = scmp.eq.s32.totalorder %s25, 0
      %p198 = por %p196, %p197
      %p199 = scmp.ne.s32.totalorder %s185, %s186
      %p200 = scmp.eq.s32.totalorder %s26, 1
      %p201 = por %p199, %p200
      %p203 = scmp.ne.s32.totalorder %s186, %s202
      %p204 = scmp.eq.s32.totalorder %s26, 0
      %p205 = por %p203, %p204
      %p206 = scmp.le.s32.totalorder 1, %s20
      %p207 = scmp.lt.s32.totalorder %s20, 3
      %p208 = pnand %p206, %p207
      %p209 = pneg %p208
      // Predicated region
      $region9: #{tpu_custom_call.1} parent=5 // pred_check
        _
      $region10: #{tpu_custom_call.1} parent=5 // pred_check_branch
        %211 = sbr.rel (%p208) target = $region12
      $region11: #{tpu_custom_call.1} parent=5 // pred_region
        %s212 = ssub.s32 %s20, 1
        // Predicated region
        $region13: #{tpu_custom_call.1} parent=11 // pred_check
          %p213 = pneg %p67
        $region14: #{tpu_custom_call.1} parent=11 // pred_check_branch
          %215 = sbr.rel (%p213) target = $region16
        $region15: #{tpu_custom_call.1} parent=11 // pred_region
          _
        $region16: #{tpu_custom_call.1} parent=11 // pred_fallthru
          _
        // Predicated region
        $region17: #{tpu_custom_call.1} parent=11 // pred_check
          %p216 = pneg %p88
        $region18: #{tpu_custom_call.1} parent=11 // pred_check_branch
          %218 = sbr.rel (%p216) target = $region20
        $region19: #{tpu_custom_call.1} parent=11 // pred_region
          %220 = vsyncadd [#allocation6], 0
          %s222 = sshll.u32 %s2, 4
          %s223 = int_to_ptr.hbm [resolvable:$true] %s222
          %s224 = sshll.u32 [#allocation5], 4
          %s225 = int_to_ptr.vmem [resolvable:$true] %s224
          %227 = dma.hbm_to_vmem [thread:$0]  %s223, 16, %s225, [#allocation6]
        $region20: #{tpu_custom_call.1} parent=11 // pred_fallthru
          _
        // Predicated region
        $region21: #{tpu_custom_call.1} parent=11 // pred_check
          %p228 = pneg %p109
        $region22: #{tpu_custom_call.1} parent=11 // pred_check_branch
          %230 = sbr.rel (%p228) target = $region24
        $region23: #{tpu_custom_call.1} parent=11 // pred_region
          _
        $region24: #{tpu_custom_call.1} parent=11 // pred_fallthru
          _
        // Predicated region
        $region25: #{tpu_custom_call.1} parent=11 // pred_check
          %p231 = pneg %p130
        $region26: #{tpu_custom_call.1} parent=11 // pred_check_branch
          %233 = sbr.rel (%p231) target = $region28
        $region27: #{tpu_custom_call.1} parent=11 // pred_region
          _
        $region28: #{tpu_custom_call.1} parent=11 // pred_fallthru
          _
        // Predicated region
        $region29: #{tpu_custom_call.1} parent=11 // pred_check
          %p234 = pneg %p151
        $region30: #{tpu_custom_call.1} parent=11 // pred_check_branch
          %236 = sbr.rel (%p234) target = $region32
        $region31: #{tpu_custom_call.1} parent=11 // pred_region
          %238 = vsyncadd [#allocation6], 0
          %s239 = sshll.u32 %s5, 4
          %s240 = int_to_ptr.hbm [resolvable:$true] %s239
          %s241 = sshll.u32 [#allocation7], 4
          %s242 = int_to_ptr.vmem [resolvable:$true] %s241
          %247 = dma.hbm_to_vmem [thread:$0]  %s240, 512, %s242, [#allocation6], 128, 128, 8
        $region32: #{tpu_custom_call.1} parent=11 // pred_fallthru
          _
        // Predicated region
        $region33: #{tpu_custom_call.1} parent=11 // pred_check
          %p248 = pneg %p172
        $region34: #{tpu_custom_call.1} parent=11 // pred_check_branch
          %250 = sbr.rel (%p248) target = $region36
        $region35: #{tpu_custom_call.1} parent=11 // pred_region
          _
        $region36: #{tpu_custom_call.1} parent=11 // pred_fallthru
          _
      $region12: #{tpu_custom_call.1} parent=5 // pred_fallthru
        _
      %p251 = scmp.lt.s32.totalorder %s20, 2
      // Predicated region
      $region37: #{tpu_custom_call.1} parent=5 // pred_check
        %p252 = pneg %p251
      $region38: #{tpu_custom_call.1} parent=5 // pred_check_branch
        %254 = sbr.rel (%p252) target = $region40
      $region39: #{tpu_custom_call.1} parent=5 // pred_region
        // Predicated region
        $region41: #{tpu_custom_call.1} parent=39 // pred_check
          %p255 = pneg %p40
        $region42: #{tpu_custom_call.1} parent=39 // pred_check_branch
          %257 = sbr.rel (%p255) target = $region44
        $region43: #{tpu_custom_call.1} parent=39 // pred_region
          %s258 = sand.u32 %s30, 1
          %s259 = scalar_lea.sflag [#allocation3], %s258
          %s260 = sand.u32 %s30, 1
          %s261 = smul.addr %s260, 32
          %s262 = scalar_lea.vmem [#allocation2], %s261
          %s263 = smul.u32 4, %s20
          %265 = vsyncadd %s259, 0
          %s266 = smul.addr %s263, 8
          %s267 = scalar_lea.hbm %s0, %s266
          %s268 = sshll.u32 %s267, 4
          %s269 = int_to_ptr.hbm [resolvable:$true] %s268
          %s270 = sshll.u32 %s262, 4
          %s271 = int_to_ptr.vmem [resolvable:$true] %s270
          %276 = dma.hbm_to_vmem [thread:$0]  %s269, 512, %s271, %s259, 128, 128, 8
        $region44: #{tpu_custom_call.1} parent=39 // pred_fallthru
          _
      $region40: #{tpu_custom_call.1} parent=5 // pred_fallthru
        _
      %p277 = scmp.le.s32.totalorder 1, %s20
      %p278 = scmp.lt.s32.totalorder %s20, 3
      %p279 = pnand %p277, %p278
      %p280 = pneg %p279
      // Predicated region
      $region45: #{tpu_custom_call.1} parent=5 // pred_check
        _
      $region46: #{tpu_custom_call.1} parent=5 // pred_check_branch
        %282 = sbr.rel (%p279) target = $region48
      $region47: #{tpu_custom_call.1} parent=5 // pred_region
        %s283 = ssub.s32 %s20, 1
        %s284 = sand.u32 %s33, 1
        %s285 = scalar_lea.sflag [#allocation3], %s284
        %s286 = sand.u32 %s33, 1
        %s287 = smul.addr %s286, 32
        %s288 = scalar_lea.vmem [#allocation2], %s287
        // Predicated region
        $region49: #{tpu_custom_call.1} parent=47 // pred_check
          %p289 = pneg %p46
        $region50: #{tpu_custom_call.1} parent=47 // pred_check_branch
          %291 = sbr.rel (%p289) target = $region52
        $region51: #{tpu_custom_call.1} parent=47 // pred_region
          %293 = dma.done %s285, 512
        $region52: #{tpu_custom_call.1} parent=47 // pred_fallthru
          _
        // Predicated region
        $region53: #{tpu_custom_call.1} parent=47 // pred_check
          %p294 = pneg %p88
        $region54: #{tpu_custom_call.1} parent=47 // pred_check_branch
          %296 = sbr.rel (%p294) target = $region56
        $region55: #{tpu_custom_call.1} parent=47 // pred_region
          %298 = dma.done [#allocation6], 16
        $region56: #{tpu_custom_call.1} parent=47 // pred_fallthru
          _
        // Predicated region
        $region57: #{tpu_custom_call.1} parent=47 // pred_check
          %p299 = pneg %p151
        $region58: #{tpu_custom_call.1} parent=47 // pred_check_branch
          %301 = sbr.rel (%p299) target = $region60
        $region59: #{tpu_custom_call.1} parent=47 // pred_region
          %303 = dma.done [#allocation6], 512
        $region60: #{tpu_custom_call.1} parent=47 // pred_fallthru
          _
        %s304 = sand.u32 %s33, 1
        %s305 = scalar_lea.sflag [#allocation3], %s304
        %s306 = sand.u32 %s33, 1
        %s307 = smul.addr %s306, 32
        %s308 = scalar_lea.vmem [#allocation2], %s307
        %p309 = pneg %p46
        %p310 = pneg %p43
        %p311 = pneg %p67
        %p312 = pneg %p64
        %p313 = pneg %p88
        %p314 = pneg %p85
        %p315 = pneg %p109
        %p316 = pneg %p106
        %p317 = pneg %p130
        %p318 = pneg %p127
        %p319 = pneg %p151
        %p320 = pneg %p148
        %p321 = pneg %p172
        %p322 = pneg %p169
        %p323 = pneg %p198
        %p324 = pneg %p195
        %s325 = sand.u32 %s185, 1
        %s326 = scalar_lea.sflag [#allocation4], %s325
        %s327 = sand.u32 %s185, 1
        %s328 = smul.addr %s327, 32
        %s329 = scalar_lea.vmem [#allocation8], %s328
        %s330 = smul.u32 4, %s25
        %s331 = smul.u32 4, %s25
        %v332 = vld [vmem:[%s288] sm:$0xff]
        %v333 = vld [vmem:[%s288 + $0x8] sm:$0xff]
        %v334 = vld [vmem:[%s288 + $0x10] sm:$0xff]
        %v335 = vld [vmem:[%s288 + $0x18] sm:$0xff]
        %v336 = vld [vmem:[%s1] sm:$0xff]
        %v337 = vld [vmem:[%s1 + $0x8] sm:$0xff]
        %v338 = vld [vmem:[%s1 + $0x10] sm:$0xff]
        %v339 = vld [vmem:[%s1 + $0x18] sm:$0xff]
        %v340 = vld [vmem:[%s1 + $0x20] sm:$0xff]
        %v341 = vld [vmem:[%s1 + $0x28] sm:$0xff]
        %v342 = vld [vmem:[%s1 + $0x30] sm:$0xff]
        %v343 = vld [vmem:[%s1 + $0x38] sm:$0xff]
        %v344 = vld [vmem:[#allocation5] sm:$0x1]
        %v346 = vperm.slane %v344, 0
        %vm348 = vcmask 523264
        %v350 = vsel %vm348, %v332, 0
        %v353 = vsel %vm348, %v333, 0
        %v356 = vsel %vm348, %v334, 0
        %v359 = vsel %vm348, %v335, 0
        %361 = vmatpush.msra.mxu0 0.0
        %362 = vmatpush.msra.mxu0 0.0
        %363 = vmatpush.msra.mxu0 0.0
        %364 = vmatpush.msra.mxu0 0.0
        %365 = vmatpush.msra.mxu0 0.0
        %366 = vmatpush.msra.mxu0 0.0
        %367 = vmatpush.msra.mxu0 0.0
        %368 = vmatpush.msra.mxu0 0.0
        %369 = vmatpush.msra.mxu0 %v343
        %370 = vmatpush.msra.mxu0 %v342
        %371 = vmatpush.msra.mxu0 %v341
        %372 = vmatpush.msra.mxu0 %v340
        %373 = vmatpush.msra.mxu0 %v339
        %374 = vmatpush.msra.mxu0 %v338
        %375 = vmatpush.msra.mxu0 %v337
        %376 = vmatpush.msra.mxu0 %v336
        %377 = vmatmul.f32.gmra.mxu0 %v350
        %v378 = vpop.f32.mrf.mxu0
        %v379 = vadd.f32 %v346, %v378
        %380 = vmatmul.f32.gmra.mxu0 %v353
        %v381 = vpop.f32.mrf.mxu0
        %v382 = vadd.f32 %v346, %v381
        %383 = vmatmul.f32.gmra.mxu0 %v356
        %v384 = vpop.f32.mrf.mxu0
        %v385 = vadd.f32 %v346, %v384
        %386 = vmatmul.f32.gmra.mxu0 %v359
        %v387 = vpop.f32.mrf.mxu0
        %v388 = vadd.f32 %v346, %v387
        %389 = vdwg.mxu0
        %v390 = vld [vmem:[%s3] sm:$0xff]
        %v391 = vld [vmem:[%s3 + $0x8] sm:$0xff]
        %v392 = vld [vmem:[%s3 + $0x10] sm:$0xff]
        %v393 = vld [vmem:[%s3 + $0x18] sm:$0xff]
        %v394 = vld [vmem:[%s4] sm:$0x1]
        %v396 = vperm.slane %v394, 0
        %vm398 = vcmask 261120
        %v400 = vsel %vm398, %v379, 0
        %v403 = vsel %vm398, %v382, 0
        %v406 = vsel %vm398, %v385, 0
        %v409 = vsel %vm398, %v388, 0
        %411 = vmatpush.msra.mxu0 0.0
        %412 = vmatpush.msra.mxu0 0.0
        %413 = vmatpush.msra.mxu0 0.0
        %414 = vmatpush.msra.mxu0 0.0
        %415 = vmatpush.msra.mxu0 0.0
        %416 = vmatpush.msra.mxu0 0.0
        %417 = vmatpush.msra.mxu0 0.0
        %418 = vmatpush.msra.mxu0 0.0
        %419 = vmatpush.msra.mxu0 0.0
        %420 = vmatpush.msra.mxu0 0.0
        %421 = vmatpush.msra.mxu0 0.0
        %422 = vmatpush.msra.mxu0 0.0
        %423 = vmatpush.msra.mxu0 %v393
        %424 = vmatpush.msra.mxu0 %v392
        %425 = vmatpush.msra.mxu0 %v391
        %426 = vmatpush.msra.mxu0 %v390
        %427 = vmatmul.f32.gmra.mxu0 %v400
        %v428 = vpop.f32.mrf.mxu0
        %v429 = vadd.f32 %v396, %v428
        %430 = vmatmul.f32.gmra.mxu0 %v403
        %v431 = vpop.f32.mrf.mxu0
        %v432 = vadd.f32 %v396, %v431
        %433 = vmatmul.f32.gmra.mxu0 %v406
        %v434 = vpop.f32.mrf.mxu0
        %v435 = vadd.f32 %v396, %v434
        %436 = vmatmul.f32.gmra.mxu0 %v409
        %v437 = vpop.f32.mrf.mxu0
        %v438 = vadd.f32 %v396, %v437
        %439 = vdwg.mxu0
        %s440 = scalar_lea.vmem %s3, 32
        %v441 = vld [vmem:[%s440] sm:$0xff]
        %v442 = vld [vmem:[%s440 + $0x8] sm:$0xff]
        %v443 = vld [vmem:[%s440 + $0x10] sm:$0xff]
        %v444 = vld [vmem:[%s440 + $0x18] sm:$0xff]
        %s445 = scalar_lea.vmem %s4, 1
        %v446 = vld [vmem:[%s445] sm:$0x1]
        %v448 = vperm.slane %v446, 0
        %v451 = vsel %vm398, %v429, 0
        %v454 = vsel %vm398, %v432, 0
        %v457 = vsel %vm398, %v435, 0
        %v460 = vsel %vm398, %v438, 0
        %462 = vmatpush.msra.mxu0 0.0
        %463 = vmatpush.msra.mxu0 0.0
        %464 = vmatpush.msra.mxu0 0.0
        %465 = vmatpush.msra.mxu0 0.0
        %466 = vmatpush.msra.mxu0 0.0
        %467 = vmatpush.msra.mxu0 0.0
        %468 = vmatpush.msra.mxu0 0.0
        %469 = vmatpush.msra.mxu0 0.0
        %470 = vmatpush.msra.mxu0 0.0
        %471 = vmatpush.msra.mxu0 0.0
        %472 = vmatpush.msra.mxu0 0.0
        %473 = vmatpush.msra.mxu0 0.0
        %474 = vmatpush.msra.mxu0 %v444
        %475 = vmatpush.msra.mxu0 %v443
        %476 = vmatpush.msra.mxu0 %v442
        %477 = vmatpush.msra.mxu0 %v441
        %478 = vmatmul.f32.gmra.mxu0 %v451
        %v479 = vpop.f32.mrf.mxu0
        %v480 = vadd.f32 %v448, %v479
        %481 = vmatmul.f32.gmra.mxu0 %v454
        %v482 = vpop.f32.mrf.mxu0
        %v483 = vadd.f32 %v448, %v482
        %484 = vmatmul.f32.gmra.mxu0 %v457
        %v485 = vpop.f32.mrf.mxu0
        %v486 = vadd.f32 %v448, %v485
        %487 = vmatmul.f32.gmra.mxu0 %v460
        %v488 = vpop.f32.mrf.mxu0
        %v489 = vadd.f32 %v448, %v488
        %490 = vdwg.mxu0
        %s491 = scalar_lea.vmem %s3, 64
        %v492 = vld [vmem:[%s491] sm:$0xff]
        %v493 = vld [vmem:[%s491 + $0x8] sm:$0xff]
        %v494 = vld [vmem:[%s491 + $0x10] sm:$0xff]
        %v495 = vld [vmem:[%s491 + $0x18] sm:$0xff]
        %s496 = scalar_lea.vmem %s4, 2
        %v497 = vld [vmem:[%s496] sm:$0x1]
        %v499 = vperm.slane %v497, 0
        %v502 = vsel %vm398, %v480, 0
        %v505 = vsel %vm398, %v483, 0
        %v508 = vsel %vm398, %v486, 0
        %v511 = vsel %vm398, %v489, 0
        %513 = vmatpush.msra.mxu0 0.0
        %514 = vmatpush.msra.mxu0 0.0
        %515 = vmatpush.msra.mxu0 0.0
        %516 = vmatpush.msra.mxu0 0.0
        %517 = vmatpush.msra.mxu0 0.0
        %518 = vmatpush.msra.mxu0 0.0
        %519 = vmatpush.msra.mxu0 0.0
        %520 = vmatpush.msra.mxu0 0.0
        %521 = vmatpush.msra.mxu0 0.0
        %522 = vmatpush.msra.mxu0 0.0
        %523 = vmatpush.msra.mxu0 0.0
        %524 = vmatpush.msra.mxu0 0.0
        %525 = vmatpush.msra.mxu0 %v495
        %526 = vmatpush.msra.mxu0 %v494
        %527 = vmatpush.msra.mxu0 %v493
        %528 = vmatpush.msra.mxu0 %v492
        %529 = vmatmul.f32.gmra.mxu0 %v502
        %v530 = vpop.f32.mrf.mxu0
        %v531 = vadd.f32 %v499, %v530
        %532 = vmatmul.f32.gmra.mxu0 %v505
        %v533 = vpop.f32.mrf.mxu0
        %v534 = vadd.f32 %v499, %v533
        %535 = vmatmul.f32.gmra.mxu0 %v508
        %v536 = vpop.f32.mrf.mxu0
        %v537 = vadd.f32 %v499, %v536
        %538 = vmatmul.f32.gmra.mxu0 %v511
        %v539 = vpop.f32.mrf.mxu0
        %v540 = vadd.f32 %v499, %v539
        %541 = vdwg.mxu0
        %v542 = vld [vmem:[#allocation7] sm:$0xff]
        %v543 = vld [vmem:[#allocation7 + $0x8] sm:$0xff]
        %v544 = vld [vmem:[#allocation7 + $0x10] sm:$0xff]
        %v545 = vld [vmem:[#allocation7 + $0x18] sm:$0xff]
        %v546 = vld [vmem:[%s6] sm:$0x1]
        %v548 = vperm.slane %v546, 0
        %v551 = vsel %vm398, %v531, 0
        %v554 = vsel %vm398, %v534, 0
        %v557 = vsel %vm398, %v537, 0
        %v560 = vsel %vm398, %v540, 0
        %562 = vmatpush.msra.mxu0 0.0
        %563 = vmatpush.msra.mxu0 0.0
        %564 = vmatpush.msra.mxu0 0.0
        %565 = vmatpush.msra.mxu0 0.0
        %566 = vmatpush.msra.mxu0 0.0
        %567 = vmatpush.msra.mxu0 0.0
        %568 = vmatpush.msra.mxu0 0.0
        %569 = vmatpush.msra.mxu0 0.0
        %570 = vmatpush.msra.mxu0 0.0
        %571 = vmatpush.msra.mxu0 0.0
        %572 = vmatpush.msra.mxu0 0.0
        %573 = vmatpush.msra.mxu0 0.0
        %574 = vmatpush.msra.mxu0 %v545
        %575 = vmatpush.msra.mxu0 %v544
        %576 = vmatpush.msra.mxu0 %v543
        %577 = vmatpush.msra.mxu0 %v542
        %578 = vmatmul.f32.gmra.mxu0 %v551
        %v579 = vpop.f32.mrf.mxu0
        %v580 = vadd.f32 %v548, %v579
        %581 = vmatmul.f32.gmra.mxu0 %v554
        %v582 = vpop.f32.mrf.mxu0
        %v583 = vadd.f32 %v548, %v582
        %584 = vmatmul.f32.gmra.mxu0 %v557
        %v585 = vpop.f32.mrf.mxu0
        %v586 = vadd.f32 %v548, %v585
        %587 = vmatmul.f32.gmra.mxu0 %v560
        %v588 = vpop.f32.mrf.mxu0
        %v589 = vadd.f32 %v548, %v588
        %590 = vdwg.mxu0
        %591 = vst [vmem:[%s329] sm:$0xff] %v580
        %592 = vst [vmem:[%s329 + $0x8] sm:$0xff] %v583
        %593 = vst [vmem:[%s329 + $0x10] sm:$0xff] %v586
        %594 = vst [vmem:[%s329 + $0x18] sm:$0xff] %v589
        %s595 = sand.u32 %s185, 1
        %s596 = scalar_lea.sflag [#allocation4], %s595
        %s597 = sand.u32 %s185, 1
        %s598 = smul.addr %s597, 32
        %s599 = scalar_lea.vmem [#allocation8], %s598
        // Predicated region
        $region61: #{tpu_custom_call.1} parent=47 // pred_check
          %p600 = pneg %p195
        $region62: #{tpu_custom_call.1} parent=47 // pred_check_branch
          %602 = sbr.rel (%p600) target = $region64
        $region63: #{tpu_custom_call.1} parent=47 // pred_region
          %s603 = smul.u32 4, %s25
          %605 = vsyncadd %s596, 0
          %s606 = smul.addr %s603, 8
          %s607 = scalar_lea.hbm %s7, %s606
          %s608 = sshll.u32 %s599, 4
          %s609 = int_to_ptr.vmem [resolvable:$true] %s608
          %s610 = sshll.u32 %s607, 4
          %s611 = int_to_ptr.hbm [resolvable:$true] %s610
          %616 = dma.vmem_to_hbm [thread:$0]  %s609, 512, %s611, %s596, 128, 128, 8
        $region64: #{tpu_custom_call.1} parent=47 // pred_fallthru
          _
      $region48: #{tpu_custom_call.1} parent=5 // pred_fallthru
        _
      %p617 = scmp.le.s32.totalorder 2, %s20
      // Predicated region
      $region65: #{tpu_custom_call.1} parent=5 // pred_check
        %p618 = pneg %p617
      $region66: #{tpu_custom_call.1} parent=5 // pred_check_branch
        %620 = sbr.rel (%p618) target = $region68
      $region67: #{tpu_custom_call.1} parent=5 // pred_region
        %s621 = ssub.s32 %s20, 2
        // Predicated region
        $region69: #{tpu_custom_call.1} parent=67 // pred_check
          %p622 = pneg %p201
        $region70: #{tpu_custom_call.1} parent=67 // pred_check_branch
          %624 = sbr.rel (%p622) target = $region72
        $region71: #{tpu_custom_call.1} parent=67 // pred_region
          %s625 = sand.u32 %s186, 1
          %s626 = scalar_lea.sflag [#allocation4], %s625
          %s627 = sand.u32 %s186, 1
          %s628 = smul.addr %s627, 32
          %s629 = scalar_lea.vmem [#allocation8], %s628
          %631 = dma.done %s626, 512
        $region72: #{tpu_custom_call.1} parent=67 // pred_fallthru
          _
      $region68: #{tpu_custom_call.1} parent=5 // pred_fallthru
        _
    $region6: #{tpu_custom_call.1} parent=1 // loop_footer
      %s24 = sadd.s32 1, %s20
    $region7: #{tpu_custom_call.1} parent=1 // loop_footer_branch
      %19 = sbr.rel target = $region3
    $region8: #{tpu_custom_call.1} parent=1 // loop_exit
      _
    %632 = vsyncpa [#allocation3], 1
    %s633 = scalar_lea.sflag [#allocation3], 1
    %634 = vsyncpa %s633, 1
    %635 = vsyncpa [#allocation6], 1
    %636 = vsyncpa [#allocation4], 1
    %s637 = scalar_lea.sflag [#allocation4], 1
    %638 = vsyncpa %s637, 1

</llo_original>
